<compile_context>
chip_gen: v7x
topology: tpu7x:2x2x1
jax: 0.10.0
libtpu: 0.0.40
codegen_flags: <defaults>
</compile_context>

<pallas_src>
import functools

import numpy as np
import jax
import jax.numpy as jnp
from jax.experimental import pallas as pl
from jax.experimental.pallas import tpu as pltpu

N_BEAD_TYPE = 19           # in features
DE = 32                    # out features (embedding dim)
PACK = 4                   # logical rows packed per tile row (4 * 32 = 128 lanes)
KP = PACK * N_BEAD_TYPE    # 76  (packed reduction dim)
NP = PACK * DE             # 128 (packed, lane-dense output dim)


def _round_up(a, m):
    return ((a + m - 1) // m) * m


def _cdiv(a, b):
    return (a + b - 1) // b


def _default_tm():
    """Per-generation default tile size in packed rows.

    v7x's HBM (~3.2 TB/s per TC) makes per-step DMA so short that the fixed
    ~0.35 us grid-step overhead dominates at smaller tiles, so it gets a 2x
    larger tile (still well under its 32 MiB scoped-VMEM default).  v5e/v6e
    use 4096 (~8-10 MiB of buffered VMEM)."""
    tm = 4096
    try:
        info = pltpu.get_tpu_info()
        name = str(getattr(info, "chip_version", "")).lower()
        if "7" in name:          # v7x
            tm = 8192
    except Exception:
        pass
    return tm


def _packed_linear_kernel(x_ref, w_ref, b_ref, o_ref):
    # x_ref: (tm, 76), w_ref: (76, 128) block-diagonal = diag(W, W, W, W),
    # b_ref: (1, 128) = [b, b, b, b], o_ref: (tm, 128).
    # Column block j of output row i holds logical row 4*i + j of (M,19)@(19,32)+b.
    acc = jnp.dot(x_ref[...], w_ref[...], preferred_element_type=jnp.float32)
    o_ref[...] = (acc + b_ref[...]).astype(o_ref.dtype)


def pack_params(w, b):
    """Precompute the packed weight/bias once (38 KiB) instead of per call."""
    w_blk = jnp.kron(jnp.eye(PACK, dtype=w.dtype), w)     # (76, 128) block-diagonal
    b_blk = jnp.tile(b.reshape(1, DE), (1, PACK))          # (1, 128)
    return w_blk, b_blk


def _x_block_spec(tm_eff, n_buf):
    """Streamed-x BlockSpec; triple-buffered when the grid is deep enough."""
    if n_buf is not None and n_buf > 2:
        try:
            return pl.BlockSpec((tm_eff, KP), lambda i: (i, 0),
                                pipeline_mode=pl.Buffered(n_buf))
        except Exception:
            pass  # older pallas without pipeline_mode: fall back to double buffering
    return pl.BlockSpec((tm_eff, KP), lambda i: (i, 0))


def bead_type_embedding(x, w, b, *, w_blk=None, b_blk=None, tm=None,
                        min_pallas_rows=65536):
    """x: [..., 19] -> [..., 32] via x @ w + b.

    w is stored (in=19, out=32) (transpose of PyTorch (out, in)); b is (32,).
    `tm` is the tile size in *packed* rows (1 packed row = 4 logical rows).
    Below `min_pallas_rows` logical rows a plain XLA matmul is used.
    """
    assert x.shape[-1] == N_BEAD_TYPE
    orig_lead = x.shape[:-1]
    M = int(np.prod(orig_lead)) if orig_lead else 1

    # ---- small-M fast path: a single fused XLA matmul beats the pallas_call
    # launch + packing overhead for latency-sized inputs.
    if M < min_pallas_rows:
        out = (jnp.dot(x.reshape(M, N_BEAD_TYPE), w,
                       preferred_element_type=jnp.float32)
               + b).astype(x.dtype)
        return out.reshape(*orig_lead, DE)

    if tm is None:
        tm = _default_tm()
    if w_blk is None or b_blk is None:
        w_blk, b_blk = pack_params(w, b)

    x2 = x.reshape(M, N_BEAD_TYPE)

    # Pack 4 logical rows per tile row.  Pad (<= 3 rows) only when M is not a
    # multiple of PACK; the common case does no wrapper-side array copies.
    M4 = _round_up(M, PACK)
    if M4 != M:
        x2 = jnp.pad(x2, ((0, M4 - M), (0, 0)))
    Mp = M4 // PACK
    xp = x2.reshape(Mp, KP)        # pure row-major re-view

    itemsize = jnp.dtype(x.dtype).itemsize
    # dtype-dependent minimum sublane tile: 8 (f32), 16 (bf16), 32 (int8/fp8)
    sub = max(8, 32 // itemsize)

    # Clamp the tile, but keep >= 2 grid steps whenever possible so v7x's two
    # TensorCores both get work.  Ragged last blocks are clipped by Pallas.
    tm_eff = _round_up(int(min(tm, _round_up(_cdiv(Mp, 2), sub))), sub)
    grid_steps = _cdiv(Mp, tm_eff)

    cost = pl.CostEstimate(
        flops=2 * M * N_BEAD_TYPE * DE,
        transcendentals=0,
        bytes_accessed=M * (N_BEAD_TYPE + DE) * itemsize
        + KP * NP * jnp.dtype(w_blk.dtype).itemsize,
    )

    out_p = pl.pallas_call(
        _packed_linear_kernel,
        out_shape=jax.ShapeDtypeStruct((Mp, NP), x.dtype),
        grid=(grid_steps,),
        in_specs=[
            _x_block_spec(tm_eff, 3 if grid_steps >= 3 else None),  # x (streamed)
            pl.BlockSpec((KP, NP), lambda i: (0, 0)),               # weight (resident)
            pl.BlockSpec((1, NP), lambda i: (0, 0)),                # bias (resident)
        ],
        out_specs=pl.BlockSpec((tm_eff, NP), lambda i: (i, 0)),
        compiler_params=pltpu.CompilerParams(
            dimension_semantics=("parallel",),
            vmem_limit_bytes=32 * 1024 * 1024,   # covers tm=8192 + triple buffering
        ),
        cost_estimate=cost,
    )(xp, w_blk, b_blk)

    # (Mp, 128) -> (M4, 32) is again a pure row-major re-view.
    out = out_p.reshape(M4, DE)
    if M4 != M:
        out = out[:M]
    return out.reshape(*orig_lead, DE)


def init_params(key):
    """Deterministic init mimicking PyTorch nn.Linear(19, 32) default:
    U(-1/sqrt(fan_in), 1/sqrt(fan_in)) for both weight and bias."""
    k_w, k_b = jax.random.split(key)
    bound = 1.0 / np.sqrt(N_BEAD_TYPE)
    # stored as (in, out) for the kernel (transpose of PyTorch (out, in))
    w = jax.random.uniform(k_w, (N_BEAD_TYPE, DE), jnp.float32,
                           minval=-bound, maxval=bound)
    b = jax.random.uniform(k_b, (DE,), jnp.float32,
                           minval=-bound, maxval=bound)
    return w, b


if __name__ == "__main__":
    key = jax.random.PRNGKey(0)
    k_x1, k_x2, k_x3, k_p = jax.random.split(key, 4)

    w, b = init_params(k_p)
    w_blk, b_blk = pack_params(w, b)

    def ref(x):
        return jnp.einsum("...k,kd->...d", x, w) + b

    # Force the Pallas path (min_pallas_rows=0) so the kernel itself is tested.
    fwd = jax.jit(functools.partial(bead_type_embedding, min_pallas_rows=0))

    # 1) small input (batch=2, seq=8 beads): single grid step.
    x1 = jax.random.uniform(k_x1, (2, 8, N_BEAD_TYPE), jnp.float32)
    o1 = jax.block_until_ready(fwd(x1, w, b, w_blk=w_blk, b_blk=b_blk))
    assert o1.shape == (2, 8, DE)
    np.testing.assert_allclose(np.asarray(o1), np.asarray(ref(x1)),
                               rtol=1e-5, atol=1e-5)

    # 2) mid input: >= 2 grid steps (both v7x TensorCores get work).
    x2 = jax.random.uniform(k_x2, (4, 1024, N_BEAD_TYPE), jnp.float32)
    o2 = jax.block_until_ready(fwd(x2, w, b, w_blk=w_blk, b_blk=b_blk))
    np.testing.assert_allclose(np.asarray(o2), np.asarray(ref(x2)),
                               rtol=1e-5, atol=1e-5)

    # 3) ragged M (not a multiple of 4) with a small tm so the grid has >= 3
    #    steps: exercises the pad path, clipped last block and Buffered(3).
    x3 = jax.random.uniform(k_x3, (3, 1001, N_BEAD_TYPE), jnp.float32)
    fwd3 = jax.jit(functools.partial(bead_type_embedding,
                                     min_pallas_rows=0, tm=256))
    o3 = jax.block_until_ready(fwd3(x3, w, b, w_blk=w_blk, b_blk=b_blk))
    np.testing.assert_allclose(np.asarray(o3), np.asarray(ref(x3)),
                               rtol=1e-5, atol=1e-5)

    # 4) default configuration (small-M fast path) sanity check.
    o4 = jax.block_until_ready(jax.jit(bead_type_embedding)(x1, w, b))
    np.testing.assert_allclose(np.asarray(o4), np.asarray(ref(x1)),
                               rtol=1e-5, atol=1e-5)

    print("KERNEL_OK")
</pallas_src>

<mosaic_0001>
module attributes {stable_mosaic.version = 11 : i64} {
  func.func @_packed_linear_kernel(%arg0: i32, %arg1: memref<8x76xf32, #tpu.memory_space<vmem>>, %arg2: memref<76x128xf32, #tpu.memory_space<vmem>>, %arg3: memref<1x128xf32, #tpu.memory_space<vmem>>, %arg4: memref<8x128xf32, #tpu.memory_space<vmem>>) attributes {dimension_semantics = [#tpu.dimension_semantics<parallel>], iteration_bounds = array<i64: 1>, scalar_prefetch = 0 : i64, scratch_operands = 0 : i64, tpu.core_type = #tpu.core_type<tc>, window_params = [{transform_indices = @transform_0, window_bounds = array<i64: 8, 76>}, {pipeline_mode = #tpu.pipeline_mode<synchronous>, transform_indices = @transform_1, window_bounds = array<i64: 76, 128>}, {pipeline_mode = #tpu.pipeline_mode<synchronous>, transform_indices = @transform_2, window_bounds = array<i64: 1, 128>}, {transform_indices = @transform_3, window_bounds = array<i64: 8, 128>}]} {
    %c0 = arith.constant 0 : index
    %c0_0 = arith.constant 0 : index
    %0 = vector.load %arg1[%c0, %c0_0] : memref<8x76xf32, #tpu.memory_space<vmem>>, vector<8x76xf32>
    %c0_1 = arith.constant 0 : index
    %c0_2 = arith.constant 0 : index
    %1 = vector.load %arg2[%c0_1, %c0_2] : memref<76x128xf32, #tpu.memory_space<vmem>>, vector<76x128xf32>
    %cst = arith.constant dense<0.000000e+00> : vector<8x128xf32>
    %2 = tpu.matmul %0, %1, %cst {dimension_numbers = #tpu.dot_dimension_numbers<[1], [0], [0], [1], [0, 0, 1, 1], [], []>} : vector<8x76xf32>, vector<76x128xf32>, vector<8x128xf32> -> vector<8x128xf32>
    %c0_3 = arith.constant 0 : index
    %c0_4 = arith.constant 0 : index
    %3 = vector.load %arg3[%c0_3, %c0_4] : memref<1x128xf32, #tpu.memory_space<vmem>>, vector<1x128xf32>
    %4 = vector.broadcast %3 : vector<1x128xf32> to vector<8x128xf32>
    %5 = arith.addf %2, %4 : vector<8x128xf32>
    %c0_5 = arith.constant 0 : index
    %c0_6 = arith.constant 0 : index
    %6 = vector.load %arg4[%c0_5, %c0_6] : memref<8x128xf32, #tpu.memory_space<vmem>>, vector<8x128xf32>
    tpu.vector_store %arg4[%c0_5, %c0_6], %5 {strides = array<i32>} : memref<8x128xf32, #tpu.memory_space<vmem>>, vector<8x128xf32>,
    return
  }
  func.func @transform_0(%arg0: i32) -> (i32, i32) {
    %c0_i32 = arith.constant 0 : i32
    %c0_i32_0 = arith.constant 0 : i32
    return %arg0, %c0_i32 : i32, i32
  }
  func.func @transform_1(%arg0: i32) -> (i32, i32) {
    %c0_i32 = arith.constant 0 : i32
    %c0_i32_0 = arith.constant 0 : i32
    %c0_i32_1 = arith.constant 0 : i32
    return %c0_i32, %c0_i32_0 : i32, i32
  }
  func.func @transform_2(%arg0: i32) -> (i32, i32) {
    %c0_i32 = arith.constant 0 : i32
    %c0_i32_0 = arith.constant 0 : i32
    %c0_i32_1 = arith.constant 0 : i32
    return %c0_i32, %c0_i32_0 : i32, i32
  }
  func.func @transform_3(%arg0: i32) -> (i32, i32) {
    %c0_i32 = arith.constant 0 : i32
    %c0_i32_0 = arith.constant 0 : i32
    return %arg0, %c0_i32 : i32, i32
  }
}

</mosaic_0001>

<llo_original>
// kernel: bead_type_embedding.1
$region0: #{bead_type_embedding.1}
  #allocation0 [shape = 'u32[]', space=smem, size = 0x4, offset = 0x4, fixed_abs, tag = 'smem constant byte address 0x4 - core index']
  #allocation1 [shape = 'u32[144,128]{1,0:T(1,128)}', space=vmem, size = 0x12000, scoped, tag = 'internal scratch']
  %s0 = inlined_call_operand.vmem [shape: f32[4,76], index: 0, kind: input, shape index: {}]
  %s1 = inlined_call_operand.hbm [shape: f32[76,128], index: 1, kind: input, shape index: {}]
  %s2 = inlined_call_operand.vmem [shape: f32[1,128], index: 2, kind: input, shape index: {}]
  %s3 = inlined_call_operand.vmem [shape: f32[4,128], index: 3, kind: output, shape index: {}]
  %s4 = sld [smem:[#allocation0]]
  $region56: #{bead_type_embedding.1} parent=0
    _
  %s6 = ssub.s32 1, %s4
  %s7 = scalar_select 0, %s6, %s4
  $region1: #{bead_type_embedding.1} parent=0
    #allocation2 [shape = 'u8[40960]{0}', space=vmem, size = 0xa000, scoped, tag = 'input window, operand 1, single buffered']
    #allocation3 [shape = 's32[1]{0}', space=sflag, size = 0x4, scoped, tag = 'scoped memory for bead_type_embedding.1']
    #allocation4 [shape = 'u8[4096]{0}', space=vmem, size = 0x1000, scoped, tag = 'output window, operand 0, single buffered']
    %8 = vsyncpa [#allocation3], 0
    // Predicated region
    $region2: #{bead_type_embedding.1} parent=1 // pred_check
      _
    $region3: #{bead_type_embedding.1} parent=1 // pred_check_branch
      %10 = sbr.rel (0) target = $region5
    $region4: #{bead_type_embedding.1} parent=1 // pred_region
      _
    $region5: #{bead_type_embedding.1} parent=1 // pred_fallthru
      _
    // Predicated region
    $region6: #{bead_type_embedding.1} parent=1 // pred_check
      _
    $region7: #{bead_type_embedding.1} parent=1 // pred_check_branch
      %12 = sbr.rel (0) target = $region9
    $region8: #{bead_type_embedding.1} parent=1 // pred_region
      %s14 = ssub.s32 1280, 1280
      %15 = vsyncadd [#allocation3], %s14
      %s16 = sshll.u32 [#allocation2], 4
      %s17 = int_to_ptr.vmem [resolvable:$true] %s16
      %22 = dma.hbm_to_vmem [thread:$0]  %s1, 1280, %s17, [#allocation3], 128, 128, 8
    $region9: #{bead_type_embedding.1} parent=1 // pred_fallthru
      _
    // Predicated region
    $region10: #{bead_type_embedding.1} parent=1 // pred_check
      _
    $region11: #{bead_type_embedding.1} parent=1 // pred_check_branch
      %24 = sbr.rel (0) target = $region13
    $region12: #{bead_type_embedding.1} parent=1 // pred_region
      _
    $region13: #{bead_type_embedding.1} parent=1 // pred_fallthru
      _
    // Predicated region
    $region14: #{bead_type_embedding.1} parent=1 // pred_check
      _
    $region15: #{bead_type_embedding.1} parent=1 // pred_check_branch
      %26 = sbr.rel (0) target = $region17
    $region16: #{bead_type_embedding.1} parent=1 // pred_region
      %27 = dma.done [#allocation3], 1280
    $region17: #{bead_type_embedding.1} parent=1 // pred_fallthru
      _
    %v28 = vld [vmem:[%s0] sm:$0xff]
    %v29 = vld [vmem:[#allocation2] sm:$0xff]
    %v30 = vld [vmem:[#allocation2 + $0x8] sm:$0xff]
    %v31 = vld [vmem:[#allocation2 + $0x10] sm:$0xff]
    %v32 = vld [vmem:[#allocation2 + $0x18] sm:$0xff]
    %v33 = vld [vmem:[#allocation2 + $0x20] sm:$0xff]
    %v34 = vld [vmem:[#allocation2 + $0x28] sm:$0xff]
    %v35 = vld [vmem:[#allocation2 + $0x30] sm:$0xff]
    %v36 = vld [vmem:[#allocation2 + $0x38] sm:$0xff]
    %v37 = vld [vmem:[#allocation2 + $0x40] sm:$0xff]
    %v38 = vld [vmem:[#allocation2 + $0x48] sm:$0xf]
    %v39 = vld [vmem:[%s2] sm:$0x1]
    %v41 = vlaneseq
    %v42 = vshrl.u32 %v41, 7
    %v43 = vsub.s32 0, %v42
    %v44 = vrot.slane %v39, %v43
    %vm46 = vcmask 621568
    %v48 = vsel %vm46, %v28, 0
    %vm50 = vcmask 1043456
    %v52 = vsel %vm50, %v38, 0
    %54 = vmatprep.subr.mxu0 0.0
    %55 = vmatpush1.msra.mxu0 %v29
    %56 = vmatprep.subr.mxu0 0.0
    %57 = vmatpush1.msra.mxu0 %v30
    %58 = vmatprep.subr.mxu0 0.0
    %59 = vmatpush1.msra.mxu0 %v31
    %60 = vmatprep.subr.mxu0 0.0
    %61 = vmatpush1.msra.mxu0 %v32
    %62 = vmatprep.subr.mxu0 0.0
    %63 = vmatpush1.msra.mxu0 %v33
    %64 = vmatprep.subr.mxu0 0.0
    %65 = vmatpush1.msra.mxu0 %v34
    %66 = vmatprep.subr.mxu0 0.0
    %67 = vmatpush1.msra.mxu0 %v35
    %68 = vmatprep.subr.mxu0 0.0
    %69 = vmatpush1.msra.mxu0 %v36
    %70 = vmatprep.subr.mxu0 0.0
    %71 = vmatpush1.msra.mxu0 %v37
    %72 = vmatprep.subr.mxu0 0.0
    %73 = vmatpush1.msra.mxu0 %v52
    %74 = vmatprep.subr.mxu0 0.0
    %75 = vmatpush1.msra.mxu0 0.0
    %76 = vmatprep.subr.mxu0 0.0
    %77 = vmatpush1.msra.mxu0 0.0
    %78 = vmatprep.subr.mxu0 0.0
    %79 = vmatpush1.msra.mxu0 0.0
    %80 = vmatprep.subr.mxu0 0.0
    %81 = vmatpush1.msra.mxu0 0.0
    %82 = vmatprep.subr.mxu0 0.0
    %83 = vmatpush1.msra.mxu0 0.0
    %84 = vmatprep.subr.mxu0 0.0
    %85 = vmatpush1.msra.mxu0 0.0
    %86 = vmatprep.subr.mxu0 0.0
    %87 = vmatpush1.msra.mxu0 0.0
    %88 = vmatprep.subr.mxu0 0.0
    %89 = vmatpush1.msra.mxu0 0.0
    %90 = vmatprep.subr.mxu0 0.0
    %91 = vmatpush1.msra.mxu0 0.0
    %92 = vmatprep.subr.mxu0 0.0
    %93 = vmatpush1.msra.mxu0 0.0
    %94 = vmatprep.subr.mxu0 0.0
    %95 = vmatpush1.msra.mxu0 0.0
    %96 = vmatprep.subr.mxu0 0.0
    %97 = vmatpush1.msra.mxu0 0.0
    %98 = vmatprep.subr.mxu0 0.0
    %99 = vmatpush1.msra.mxu0 0.0
    %100 = vmatprep.subr.mxu0 0.0
    %101 = vmatpush1.msra.mxu0 0.0
    %102 = vmatprep.subr.mxu0 0.0
    %103 = vmatpush1.msra.mxu0 0.0
    %104 = vmatprep.subr.mxu0 0.0
    %105 = vmatpush1.msra.mxu0 0.0
    %106 = vmatprep.subr.mxu0 0.0
    %107 = vmatpush1.msra.mxu0 0.0
    %108 = vmatprep.subr.mxu0 0.0
    %109 = vmatpush1.msra.mxu0 0.0
    %110 = vmatprep.subr.mxu0 0.0
    %111 = vmatpush1.msra.mxu0 0.0
    %112 = vmatprep.subr.mxu0 0.0
    %113 = vmatpush1.msra.mxu0 0.0
    %114 = vmatprep.subr.mxu0 0.0
    %115 = vmatpush1.msra.mxu0 0.0
    %116 = vmatprep.subr.mxu0 0.0
    %117 = vmatpush1.msra.mxu0 0.0
    %118 = vmatprep.mubr.f32.mxu0 0.0
    %119 = vmatmul.mubr.f32.gmra.mrb[0].mxu0 %v48
    %v120 = vpop.f32.mrb[0].mxu0
    %v121 = vadd.f32 %v44, %v120
    %v122 = vpop.f32.mrb[0].mxu0
    %123 = vdwg.mxu0
    %124 = vst [vmem:[#allocation4] sm:$0xff] %v121
    // Predicated region
    $region18: #{bead_type_embedding.1} parent=1 // pred_check
      _
    $region19: #{bead_type_embedding.1} parent=1 // pred_check_branch
      %126 = sbr.rel (0) target = $region21
    $region20: #{bead_type_embedding.1} parent=1 // pred_region
      // Predicated region
      $region22: #{bead_type_embedding.1} parent=20 // pred_check
        _
      $region23: #{bead_type_embedding.1} parent=20 // pred_check_branch
        %128 = sbr.rel (0) target = $region25
      $region24: #{bead_type_embedding.1} parent=20 // pred_region
        // Predicated region
        $region26: #{bead_type_embedding.1} parent=24 // pred_check
          _
        $region27: #{bead_type_embedding.1} parent=24 // pred_check_branch
          %130 = sbr.rel target = $region29
        $region28: #{bead_type_embedding.1} parent=24 // pred_region
          // Predicated region
          $region41: #{bead_type_embedding.1} parent=28 // pred_check
            _
          $region42: #{bead_type_embedding.1} parent=28 // pred_check_branch
            %145 = sbr.rel (0) target = $region44
          $region43: #{bead_type_embedding.1} parent=28 // pred_region
            loop: start=0, step=1, limit=1
            $region45: #{bead_type_embedding.1} parent=43 // loop_pre_header
              _
            $region46: #{bead_type_embedding.1} parent=43 // loop_header
              %s148 = sphi 0, %s152
              %p149 = scmp.ge.s32.totalorder %s148, 1
              %s153 = sphi [#allocation4], [#allocation4]
              %s154 = sphi %s3, %s3
            $region47: #{bead_type_embedding.1} parent=43 // loop_header_branch
              %151 = sbr.rel (%p149) target = $region51
            $region48: #{bead_type_embedding.1} parent=43 // loop_body
              %v155 = vld [vmem:[%s153] sm:$0xf]
              %156 = vst [vmem:[%s154] sm:$0xf] %v155
            $region49: #{bead_type_embedding.1} parent=43 // loop_footer
              %s152 = sadd.s32 1, %s148
            $region50: #{bead_type_embedding.1} parent=43 // loop_footer_branch
              %147 = sbr.rel target = $region46
            $region51: #{bead_type_embedding.1} parent=43 // loop_exit
              _
          $region44: #{bead_type_embedding.1} parent=28 // pred_fallthru
            _
        $region29: #{bead_type_embedding.1} parent=24 // pred_fallthru
          _
        // Predicated region
        $region30: #{bead_type_embedding.1} parent=24 // pred_check
          _
        $region31: #{bead_type_embedding.1} parent=24 // pred_check_branch
          %132 = sbr.rel (0) target = $region33
        $region32: #{bead_type_embedding.1} parent=24 // pred_region
          loop: start=0, step=1, limit=1
          $region34: #{bead_type_embedding.1} parent=32 // loop_pre_header
            _
          $region35: #{bead_type_embedding.1} parent=32 // loop_header
            %s135 = sphi 0, %s139
            %p136 = scmp.ge.s32.totalorder %s135, 1
            %s140 = sphi [#allocation4], [#allocation4]
            %s141 = sphi %s3, %s3
          $region36: #{bead_type_embedding.1} parent=32 // loop_header_branch
            %138 = sbr.rel (%p136) target = $region40
          $region37: #{bead_type_embedding.1} parent=32 // loop_body
            %v142 = vld [vmem:[%s140] sm:$0xf]
            %143 = vst [vmem:[%s141] sm:$0xf] %v142
          $region38: #{bead_type_embedding.1} parent=32 // loop_footer
            %s139 = sadd.s32 1, %s135
          $region39: #{bead_type_embedding.1} parent=32 // loop_footer_branch
            %134 = sbr.rel target = $region35
          $region40: #{bead_type_embedding.1} parent=32 // loop_exit
            _
        $region33: #{bead_type_embedding.1} parent=24 // pred_fallthru
          _
      $region25: #{bead_type_embedding.1} parent=20 // pred_fallthru
        _
      %157 = vnop
    $region21: #{bead_type_embedding.1} parent=1 // pred_fallthru
      _
    // Predicated region
    $region52: #{bead_type_embedding.1} parent=1 // pred_check
      _
    $region53: #{bead_type_embedding.1} parent=1 // pred_check_branch
      %159 = sbr.rel (0) target = $region55
    $region54: #{bead_type_embedding.1} parent=1 // pred_region
      _
    $region55: #{bead_type_embedding.1} parent=1 // pred_fallthru
      _
    %160 = vsyncpa [#allocation3], 1

</llo_original>
